<compile_context>
chip_gen: v5e
topology: v5e:2x2
jax: 0.10.0
libtpu: 0.0.40
codegen_flags: <defaults>
</compile_context>

<pallas_src>
import functools

import jax
import jax.numpy as jnp
from jax.experimental import pallas as pl
from jax.experimental.pallas import tpu as pltpu


def _basic_block_up_kernel(x_ref, w1_ref, b1_ref, w2_ref, b2_ref, out_ref, *, img_h):
    """Fused conv1 + bn1 + relu + conv2 + bn2 + residual + relu (lane-dense).

    x_ref  : (MB, W*Cin)           f32   rows = images_per_block * H
    w1_ref : (3*W*Cin, W*Cin)      bf16  kh-concatenated banded conv1 weights (BN1 scale folded)
    b1_ref : (1, W*Cin)            f32   BN1 bias, tiled over W
    w2_ref : (3*W*Cin, W*Cout)     bf16  kh-concatenated banded conv2 weights (BN2 scale folded)
    b2_ref : (1, W*Cout)           f32   BN2 bias, tiled over W
    out_ref: (MB, W*Cout)          out_dtype
    """
    x_f32 = x_ref[...]
    mb = x_f32.shape[0]

    # Per-image row index (images are stacked along the row/sublane axis of the block).
    row_in_img = jax.lax.broadcasted_iota(jnp.int32, x_f32.shape, 0) % img_h
    is_top = row_in_img == 0            # kh=-1 tap has no source row (zero padding)
    is_bot = row_in_img == (img_h - 1)  # kh=+1 tap has no source row (zero padding)

    def conv3x3(y_f32, w_ref):
        # Row (kh) shifts on the XLU sublane axis; boundary rows (and any wrap-around /
        # cross-image leakage) are zeroed by the masks, realizing the H zero padding.
        y_m1 = jnp.where(is_top, 0.0, pltpu.roll(y_f32, 1, 0))       # y_m1[r] = y[r-1]
        y_p1 = jnp.where(is_bot, 0.0, pltpu.roll(y_f32, mb - 1, 0))  # y_p1[r] = y[r+1]
        # One deep K = 3*W*Cin dot per conv (lane-aligned concat, bf16 in / f32 acc).
        y_cat = jnp.concatenate([y_m1, y_f32, y_p1], axis=1).astype(jnp.bfloat16)
        return jnp.dot(y_cat, w_ref[...], preferred_element_type=jnp.float32)

    mid = jnp.maximum(conv3x3(x_f32, w1_ref) + b1_ref[...], 0.0)
    out = conv3x3(mid, w2_ref) + b2_ref[...] + x_f32   # residual uses unrounded f32 x
    out_ref[...] = jnp.maximum(out, 0.0).astype(out_ref.dtype)


# ----------------------------- wrapper-side prep -----------------------------

def convtranspose_weight_to_hwio(w_t):
    """ConvTranspose2d weight (Cin, Cout, 3, 3) with stride=1, padding=1 ->
    equivalent regular SAME-conv kernel in HWIO layout (3, 3, Cin, Cout)."""
    return jnp.transpose(jnp.flip(w_t, axis=(2, 3)), (2, 3, 0, 1))


def fold_bn(gamma, beta, mean, var, eps=1e-5):
    scale = gamma / jnp.sqrt(var + eps)
    return scale, beta - mean * scale


def build_banded_weights(k_hwio, width):
    """Fold the +-1 column (kw) taps of a SAME 3x3 conv into banded matrices.

    k_hwio: (3, 3, Cin, Cout) -> (3, width*Cin, width*Cout) with
    [kh, win*Cin+ci, wout*Cout+co] = k[kh, win-wout+1, ci, co] when |win-wout| <= 1,
    zero otherwise (the zero band also realizes the W-boundary zero padding).
    """
    kh, kw, cin, cout = k_hwio.shape
    wo = jnp.arange(width)
    wi = jnp.arange(width)
    kk = jnp.arange(kw)
    ind = (wi[None, :, None] == wo[None, None, :] + kk[:, None, None] - 1)
    ind = ind.astype(k_hwio.dtype)                        # (kw, win, wout)
    banded = jnp.einsum("kuv,hkio->huivo", ind, k_hwio)   # (kh, win, ci, wout, co)
    return banded.reshape(kh, width * cin, width * cout)


def basic_block_up_pallas(x_nhwc, w1_banded, b1_lane, w2_banded, b2_lane,
                          *, images_per_block=1, out_dtype=jnp.float32):
    """x_nhwc: (N, H, W, Cin) f32.  Banded weights from build_banded_weights().

    out_dtype: pass jnp.bfloat16 when the consumer is bf16 to halve HBM writeback.
    """
    N, H, W, Cin = x_nhwc.shape
    WCin = W * Cin
    WCout = w2_banded.shape[-1]
    Cout = WCout // W
    if Cout != Cin:
        # residue=True with upsample=None requires outplanes == inplanes.
        raise ValueError("BasicBlockUp residual path needs outplanes == inplanes")

    nb = N if images_per_block is None else images_per_block
    if N % nb != 0:
        raise ValueError("images_per_block must divide the batch size")
    mb = nb * H

    # Lane-dense 2-D activation slab: row = n*H + h, lane = w*Cin + ci.  Stays f32
    # (no wrapper-side cast); the kernel casts to bf16 for the MXU and keeps the f32
    # copy for the residual add.
    x2d = x_nhwc.reshape(N * H, WCin).astype(jnp.float32)

    # kh-concatenated banded weights: rows [0:WCin) = kh=0, [WCin:2*WCin) = kh=1, ...
    w1 = w1_banded.reshape(3 * WCin, WCin).astype(jnp.bfloat16)
    w2 = w2_banded.reshape(3 * WCin, WCout).astype(jnp.bfloat16)
    b1 = b1_lane.reshape(1, WCin).astype(jnp.float32)
    b2 = b2_lane.reshape(1, WCout).astype(jnp.float32)

    kernel = functools.partial(_basic_block_up_kernel, img_h=H)

    # TODO(synk): at production W*C sizes, mark the grid-invariant w1/w2 specs
    # pipeline_mode=pl.Buffered(1) and K-tile them over a reduction axis (v7x 64 MiB VMEM).
    grid_spec = pltpu.PrefetchScalarGridSpec(
        num_scalar_prefetch=0,
        grid=(N // nb,),
        in_specs=[
            pl.BlockSpec((mb, WCin), lambda b: (b, 0)),
            pl.BlockSpec((3 * WCin, WCin), lambda b: (0, 0)),
            pl.BlockSpec((1, WCin), lambda b: (0, 0)),
            pl.BlockSpec((3 * WCin, WCout), lambda b: (0, 0)),
            pl.BlockSpec((1, WCout), lambda b: (0, 0)),
        ],
        out_specs=pl.BlockSpec((mb, WCout), lambda b: (b, 0)),
    )

    out2d = pl.pallas_call(
        kernel,
        out_shape=jax.ShapeDtypeStruct((N * H, WCout), out_dtype),
        grid_spec=grid_spec,
        compiler_params=pltpu.CompilerParams(
            dimension_semantics=("parallel",)),
    )(x2d, w1, b1, w2, b2)

    return out2d.reshape(N, H, W, Cout)


# --------------------------------- reference ---------------------------------

def reference_forward(x_nhwc, k1_hwio, b1, k2_hwio, b2):
    """Pure-JAX reference (lax.conv) with the same bf16 rounding points as the kernel."""
    hp = jax.lax.Precision.HIGHEST

    def conv(x, k):
        return jax.lax.conv_general_dilated(
            x, k, window_strides=(1, 1), padding="SAME",
            dimension_numbers=("NHWC", "HWIO", "NHWC"), precision=hp)

    xq = x_nhwc.astype(jnp.bfloat16).astype(jnp.float32)
    mid = jnp.maximum(conv(xq, k1_hwio) + b1, 0.0)
    midq = mid.astype(jnp.bfloat16).astype(jnp.float32)
    # Residual adds the unrounded f32 input (PyTorch fp32 semantics), like the kernel.
    out = conv(midq, k2_hwio) + b2 + x_nhwc
    return jnp.maximum(out, 0.0)


if __name__ == "__main__":
    # residue=True & upsample=None require outplanes == inplanes; stride=1.
    N, C, H, W = 2, 8, 16, 16          # W * C = 128 -> perfectly lane-dense
    inplanes = outplanes = C

    key = jax.random.PRNGKey(0)
    keys = jax.random.split(key, 11)

    # Input in PyTorch NCHW convention, moved to NHWC for the kernel wrapper.
    x_nchw = jax.random.normal(keys[0], (N, C, H, W), jnp.float32)
    x_nhwc = jnp.transpose(x_nchw, (0, 2, 3, 1))

    # ConvTranspose2d weights: (in_channels, out_channels, 3, 3), no bias.
    w1_t = jax.random.normal(keys[1], (inplanes, inplanes, 3, 3), jnp.float32) * 0.1
    w2_t = jax.random.normal(keys[2], (inplanes, outplanes, 3, 3), jnp.float32) * 0.1

    # BatchNorm (eval-mode running statistics).
    g1 = 0.5 + jax.random.uniform(keys[3], (inplanes,), jnp.float32)
    be1 = jax.random.normal(keys[4], (inplanes,), jnp.float32) * 0.1
    m1 = jax.random.normal(keys[5], (inplanes,), jnp.float32) * 0.1
    v1 = 0.5 + jax.random.uniform(keys[6], (inplanes,), jnp.float32)
    g2 = 0.5 + jax.random.uniform(keys[7], (outplanes,), jnp.float32)
    be2 = jax.random.normal(keys[8], (outplanes,), jnp.float32) * 0.1
    m2 = jax.random.normal(keys[9], (outplanes,), jnp.float32) * 0.1
    v2 = 0.5 + jax.random.uniform(keys[10], (outplanes,), jnp.float32)

    # ConvTranspose -> regular-conv kernels, fold the BN scales into the weights.
    k1 = convtranspose_weight_to_hwio(w1_t)
    k2 = convtranspose_weight_to_hwio(w2_t)
    s1, b1 = fold_bn(g1, be1, m1, v1)
    s2, b2 = fold_bn(g2, be2, m2, v2)
    k1q = (k1 * s1[None, None, None, :]).astype(jnp.bfloat16).astype(jnp.float32)
    k2q = (k2 * s2[None, None, None, :]).astype(jnp.bfloat16).astype(jnp.float32)

    # Banded (kw-folded) weights and lane-tiled biases.
    w1_banded = build_banded_weights(k1q, W)     # (3, W*Cin, W*Cin)
    w2_banded = build_banded_weights(k2q, W)     # (3, W*Cin, W*Cout)
    b1_lane = jnp.tile(b1, W)                    # (W*Cin,)
    b2_lane = jnp.tile(b2, W)                    # (W*Cout,)

    # images_per_block=1 -> grid=(2,) "parallel": both v7x TensorCores get work.
    out_nhwc = basic_block_up_pallas(x_nhwc, w1_banded, b1_lane, w2_banded, b2_lane,
                                     images_per_block=1, out_dtype=jnp.float32)
    out_nhwc = jax.block_until_ready(out_nhwc)

    # Validate against an independent lax.conv reference (same bf16 rounding points).
    ref = reference_forward(x_nhwc, k1q, b1, k2q, b2)
    max_err = float(jnp.max(jnp.abs(out_nhwc - ref)))
    assert max_err < 2e-2, max_err

    # Back to PyTorch NCHW convention for the "module output".
    out_nchw = jnp.transpose(out_nhwc, (0, 3, 1, 2))
    assert out_nchw.shape == (N, outplanes, H, W)

    print("KERNEL_OK")
</pallas_src>

<mosaic_0001>
module attributes {stable_mosaic.version = 11 : i64} {
  func.func @_basic_block_up_kernel(%arg0: i32, %arg1: memref<16x128xf32, #tpu.memory_space<vmem>>, %arg2: memref<384x128xbf16, #tpu.memory_space<vmem>>, %arg3: memref<1x128xf32, #tpu.memory_space<vmem>>, %arg4: memref<384x128xbf16, #tpu.memory_space<vmem>>, %arg5: memref<1x128xf32, #tpu.memory_space<vmem>>, %arg6: memref<16x128xf32, #tpu.memory_space<vmem>>) attributes {dimension_semantics = [#tpu.dimension_semantics<parallel>], iteration_bounds = array<i64: 2>, scalar_prefetch = 0 : i64, scratch_operands = 0 : i64, tpu.core_type = #tpu.core_type<tc>, window_params = [{transform_indices = @transform_0, window_bounds = array<i64: 16, 128>}, {pipeline_mode = #tpu.pipeline_mode<synchronous>, transform_indices = @transform_1, window_bounds = array<i64: 384, 128>}, {pipeline_mode = #tpu.pipeline_mode<synchronous>, transform_indices = @transform_2, window_bounds = array<i64: 1, 128>}, {pipeline_mode = #tpu.pipeline_mode<synchronous>, transform_indices = @transform_3, window_bounds = array<i64: 384, 128>}, {pipeline_mode = #tpu.pipeline_mode<synchronous>, transform_indices = @transform_4, window_bounds = array<i64: 1, 128>}, {transform_indices = @transform_5, window_bounds = array<i64: 16, 128>}]} {
    %c0 = arith.constant 0 : index
    %c0_0 = arith.constant 0 : index
    %0 = vector.load %arg1[%c0, %c0_0] : memref<16x128xf32, #tpu.memory_space<vmem>>, vector<16x128xf32>
    %1 = tpu.iota {dimensions = array<i32: 0>} : vector<16x128xi32>
    %c16_i32 = arith.constant 16 : i32
    %c0_i32 = arith.constant 0 : i32
    %2 = arith.cmpi eq, %c16_i32, %c0_i32 : i32
    %c1_i32 = arith.constant 1 : i32
    %3 = arith.select %2, %c1_i32, %c16_i32 : i32
    %4 = vector.broadcast %3 : i32 to vector<16x128xi32>
    %5 = arith.remsi %1, %4 : vector<16x128xi32>
    %c0_i32_1 = arith.constant 0 : i32
    %6 = vector.broadcast %c0_i32_1 : i32 to vector<16x128xi32>
    %7 = arith.cmpi ne, %5, %6 : vector<16x128xi32>
    %c0_i32_2 = arith.constant 0 : i32
    %8 = vector.broadcast %c0_i32_2 : i32 to vector<16x128xi32>
    %9 = arith.cmpi slt, %5, %8 : vector<16x128xi32>
    %c0_i32_3 = arith.constant 0 : i32
    %10 = arith.cmpi slt, %3, %c0_i32_3 : i32
    %11 = vector.broadcast %10 : i1 to vector<16x128xi1>
    %12 = vector.broadcast %11 : vector<16x128xi1> to vector<16x128xi1>
    %13 = arith.xori %9, %12 : vector<16x128xi1>
    %14 = arith.andi %13, %7 : vector<16x128xi1>
    %15 = vector.broadcast %3 : i32 to vector<16x128xi32>
    %16 = arith.addi %5, %15 : vector<16x128xi32>
    %17 = arith.select %14, %16, %5 : vector<16x128xi1>, vector<16x128xi32>
    %c0_i32_4 = arith.constant 0 : i32
    %18 = vector.broadcast %c0_i32_4 : i32 to vector<16x128xi32>
    %19 = arith.cmpi eq, %17, %18 : vector<16x128xi32>
    %c15_i32 = arith.constant 15 : i32
    %20 = vector.broadcast %c15_i32 : i32 to vector<16x128xi32>
    %21 = arith.cmpi eq, %17, %20 : vector<16x128xi32>
    %c1_i32_5 = arith.constant 1 : i32
    %22 = tpu.dynamic_rotate %0 by %c1_i32_5 dim 0 : vector<16x128xf32>, i32 -> vector<16x128xf32>
    %cst = arith.constant 0.000000e+00 : f32
    %23 = vector.broadcast %cst : f32 to vector<16x128xf32>
    %24 = arith.select %19, %23, %22 : vector<16x128xi1>, vector<16x128xf32>
    %c15_i32_6 = arith.constant 15 : i32
    %25 = tpu.dynamic_rotate %0 by %c15_i32_6 dim 0 : vector<16x128xf32>, i32 -> vector<16x128xf32>
    %cst_7 = arith.constant 0.000000e+00 : f32
    %26 = vector.broadcast %cst_7 : f32 to vector<16x128xf32>
    %27 = arith.select %21, %26, %25 : vector<16x128xi1>, vector<16x128xf32>
    %28 = tpu.concatenate %24, %0, %27 in 1 : vector<16x128xf32>, vector<16x128xf32>, vector<16x128xf32> -> vector<16x384xf32>
    %29 = arith.truncf %28 : vector<16x384xf32> to vector<16x384xbf16>
    %c0_8 = arith.constant 0 : index
    %c0_9 = arith.constant 0 : index
    %30 = vector.load %arg2[%c0_8, %c0_9] : memref<384x128xbf16, #tpu.memory_space<vmem>>, vector<384x128xbf16>
    %cst_10 = arith.constant dense<0.000000e+00> : vector<16x128xf32>
    %31 = tpu.matmul %29, %30, %cst_10 {dimension_numbers = #tpu.dot_dimension_numbers<[1], [0], [0], [1], [0, 0, 1, 1], [], []>} : vector<16x384xbf16>, vector<384x128xbf16>, vector<16x128xf32> -> vector<16x128xf32>
    %c0_11 = arith.constant 0 : index
    %c0_12 = arith.constant 0 : index
    %32 = vector.load %arg3[%c0_11, %c0_12] : memref<1x128xf32, #tpu.memory_space<vmem>>, vector<1x128xf32>
    %33 = vector.broadcast %32 : vector<1x128xf32> to vector<16x128xf32>
    %34 = arith.addf %31, %33 : vector<16x128xf32>
    %cst_13 = arith.constant 0.000000e+00 : f32
    %35 = vector.broadcast %cst_13 : f32 to vector<16x128xf32>
    %36 = arith.maximumf %34, %35 : vector<16x128xf32>
    %c1_i32_14 = arith.constant 1 : i32
    %37 = tpu.dynamic_rotate %36 by %c1_i32_14 dim 0 : vector<16x128xf32>, i32 -> vector<16x128xf32>
    %cst_15 = arith.constant 0.000000e+00 : f32
    %38 = vector.broadcast %cst_15 : f32 to vector<16x128xf32>
    %39 = arith.select %19, %38, %37 : vector<16x128xi1>, vector<16x128xf32>
    %c15_i32_16 = arith.constant 15 : i32
    %40 = tpu.dynamic_rotate %36 by %c15_i32_16 dim 0 : vector<16x128xf32>, i32 -> vector<16x128xf32>
    %cst_17 = arith.constant 0.000000e+00 : f32
    %41 = vector.broadcast %cst_17 : f32 to vector<16x128xf32>
    %42 = arith.select %21, %41, %40 : vector<16x128xi1>, vector<16x128xf32>
    %43 = tpu.concatenate %39, %36, %42 in 1 : vector<16x128xf32>, vector<16x128xf32>, vector<16x128xf32> -> vector<16x384xf32>
    %44 = arith.truncf %43 : vector<16x384xf32> to vector<16x384xbf16>
    %c0_18 = arith.constant 0 : index
    %c0_19 = arith.constant 0 : index
    %45 = vector.load %arg4[%c0_18, %c0_19] : memref<384x128xbf16, #tpu.memory_space<vmem>>, vector<384x128xbf16>
    %cst_20 = arith.constant dense<0.000000e+00> : vector<16x128xf32>
    %46 = tpu.matmul %44, %45, %cst_20 {dimension_numbers = #tpu.dot_dimension_numbers<[1], [0], [0], [1], [0, 0, 1, 1], [], []>} : vector<16x384xbf16>, vector<384x128xbf16>, vector<16x128xf32> -> vector<16x128xf32>
    %c0_21 = arith.constant 0 : index
    %c0_22 = arith.constant 0 : index
    %47 = vector.load %arg5[%c0_21, %c0_22] : memref<1x128xf32, #tpu.memory_space<vmem>>, vector<1x128xf32>
    %48 = vector.broadcast %47 : vector<1x128xf32> to vector<16x128xf32>
    %49 = arith.addf %46, %48 : vector<16x128xf32>
    %50 = arith.addf %49, %0 : vector<16x128xf32>
    %cst_23 = arith.constant 0.000000e+00 : f32
    %51 = vector.broadcast %cst_23 : f32 to vector<16x128xf32>
    %52 = arith.maximumf %50, %51 : vector<16x128xf32>
    %c0_24 = arith.constant 0 : index
    %c0_25 = arith.constant 0 : index
    %53 = vector.load %arg6[%c0_24, %c0_25] : memref<16x128xf32, #tpu.memory_space<vmem>>, vector<16x128xf32>
    tpu.vector_store %arg6[%c0_24, %c0_25], %52 {strides = array<i32>} : memref<16x128xf32, #tpu.memory_space<vmem>>, vector<16x128xf32>,
    return
  }
  func.func @transform_0(%arg0: i32) -> (i32, i32) {
    %c0_i32 = arith.constant 0 : i32
    %c0_i32_0 = arith.constant 0 : i32
    return %arg0, %c0_i32 : i32, i32
  }
  func.func @transform_1(%arg0: i32) -> (i32, i32) {
    %c0_i32 = arith.constant 0 : i32
    %c0_i32_0 = arith.constant 0 : i32
    %c0_i32_1 = arith.constant 0 : i32
    return %c0_i32, %c0_i32_0 : i32, i32
  }
  func.func @transform_2(%arg0: i32) -> (i32, i32) {
    %c0_i32 = arith.constant 0 : i32
    %c0_i32_0 = arith.constant 0 : i32
    %c0_i32_1 = arith.constant 0 : i32
    return %c0_i32, %c0_i32_0 : i32, i32
  }
  func.func @transform_3(%arg0: i32) -> (i32, i32) {
    %c0_i32 = arith.constant 0 : i32
    %c0_i32_0 = arith.constant 0 : i32
    %c0_i32_1 = arith.constant 0 : i32
    return %c0_i32, %c0_i32_0 : i32, i32
  }
  func.func @transform_4(%arg0: i32) -> (i32, i32) {
    %c0_i32 = arith.constant 0 : i32
    %c0_i32_0 = arith.constant 0 : i32
    %c0_i32_1 = arith.constant 0 : i32
    return %c0_i32, %c0_i32_0 : i32, i32
  }
  func.func @transform_5(%arg0: i32) -> (i32, i32) {
    %c0_i32 = arith.constant 0 : i32
    %c0_i32_0 = arith.constant 0 : i32
    return %arg0, %c0_i32 : i32, i32
  }
}

</mosaic_0001>

<llo_original>
// kernel: tpu_custom_call.1
$region0: #{tpu_custom_call.1}
  #allocation0 [shape = 'u32[]', space=smem, size = 0x4, offset = 0x4, fixed_abs, tag = 'smem constant byte address 0x4 - core index']
  #allocation1 [shape = 'u32[72,128]{1,0:T(1,128)}', space=vmem, size = 0x9000, scoped, tag = 'internal scratch']
  %s0 = inlined_call_operand.hbm [shape: f32[32,128], index: 0, kind: input, shape index: {}]
  %s1 = inlined_call_operand.hbm [shape: bf16[384,128], index: 1, kind: input, shape index: {}]
  %s2 = inlined_call_operand.vmem [shape: f32[1,128], index: 2, kind: input, shape index: {}]
  %s3 = inlined_call_operand.hbm [shape: bf16[384,128], index: 3, kind: input, shape index: {}]
  %s4 = inlined_call_operand.vmem [shape: f32[1,128], index: 4, kind: input, shape index: {}]
  %s5 = inlined_call_operand.hbm [shape: f32[32,128], index: 5, kind: output, shape index: {}]
  %s6 = sld [smem:[#allocation0]]
  $region65: #{tpu_custom_call.1} parent=0
    _
  %s8 = ssub.s32 1, %s6
  %s9 = scalar_select 0, %s8, %s6
  $region1: #{tpu_custom_call.1} parent=0
    #allocation2 [shape = 'u8[16384]{0}', space=vmem, size = 0x4000, scoped, tag = 'input window, operand 0']
    #allocation3 [shape = 's32[2]{0}', space=sflag, size = 0x8, scoped, tag = 'scoped memory for tpu_custom_call.1']
    #allocation4 [shape = 's32[2]{0}', space=sflag, size = 0x8, scoped, tag = 'scoped memory for tpu_custom_call.1']
    #allocation5 [shape = 'u8[98304]{0}', space=vmem, size = 0x18000, scoped, tag = 'input window, operand 1, single buffered']
    #allocation6 [shape = 's32[1]{0}', space=sflag, size = 0x4, scoped, tag = 'scoped memory for tpu_custom_call.1']
    #allocation7 [shape = 'u8[98304]{0}', space=vmem, size = 0x18000, scoped, tag = 'input window, operand 3, single buffered']
    #allocation8 [shape = 'u8[16384]{0}', space=vmem, size = 0x4000, scoped, tag = 'output window, operand 0']
    %10 = vsyncpa [#allocation3], 0
    %s11 = scalar_lea.sflag [#allocation3], 1
    %12 = vsyncpa %s11, 0
    %13 = vsyncpa [#allocation6], 0
    %14 = vsyncpa [#allocation4], 0
    %s15 = scalar_lea.sflag [#allocation4], 1
    %16 = vsyncpa %s15, 0
    loop: start=0, step=1, limit=4
    $region2: #{tpu_custom_call.1} parent=1 // loop_pre_header
      _
    $region3: #{tpu_custom_call.1} parent=1 // loop_header
      %s18 = sphi 0, %s22
      %p19 = scmp.ge.s32.totalorder %s18, 4
      %s28 = sphi 0, %s30
      %s31 = sphi 0, %s28
      %s32 = sphi 0, %s31
      %s48 = sphi 0, %s32
      %s52 = sphi 0, %s52
      %s54 = sphi 0, %s52
      %s55 = sphi 0, %s54
      %s69 = sphi 0, %s55
      %s73 = sphi 0, %s73
      %s75 = sphi 0, %s73
      %s76 = sphi 0, %s75
      %s90 = sphi 0, %s76
      %s94 = sphi 0, %s94
      %s96 = sphi 0, %s94
      %s97 = sphi 0, %s96
      %s111 = sphi 0, %s97
      %s115 = sphi 0, %s115
      %s117 = sphi 0, %s115
      %s118 = sphi 0, %s117
      %s132 = sphi 0, %s118
      %s138 = sphi 0, %s140
      %s141 = sphi 0, %s138
      %s142 = sphi 0, %s141
      %s158 = sphi 0, %s142
    $region4: #{tpu_custom_call.1} parent=1 // loop_header_branch
      %21 = sbr.rel (%p19) target = $region8
    $region5: #{tpu_custom_call.1} parent=1 // loop_body
      %s23 = ssub.s32 %s18, 1
      %s24 = ssub.s32 %s18, 2
      %s25 = sadd.s32 %s18, 1
      %s26 = ssub.s32 %s18, %s25
      %p27 = scmp.eq.s32.totalorder %s26, 0
      %s29 = sadd.s32 %s28, 1
      %s30 = scalar_select %p27, %s28, %s29
      %p33 = pneg %p27
      %p34 = scmp.eq.s32.totalorder %s18, 1
      %p35 = por %p33, %p34
      %p36 = scmp.ne.s32.totalorder %s28, %s31
      %p37 = scmp.eq.s32.totalorder %s18, 0
      %p38 = por %p36, %p37
      %p39 = scmp.ne.s32.totalorder %s28, %s31
      %p40 = scmp.eq.s32.totalorder %s23, 1
      %p41 = por %p39, %p40
      %p42 = scmp.ne.s32.totalorder %s31, %s32
      %p43 = scmp.eq.s32.totalorder %s23, 0
      %p44 = por %p42, %p43
      %p45 = scmp.ne.s32.totalorder %s31, %s32
      %p46 = scmp.eq.s32.totalorder %s24, 1
      %p47 = por %p45, %p46
      %p49 = scmp.ne.s32.totalorder %s32, %s48
      %p50 = scmp.eq.s32.totalorder %s24, 0
      %p51 = por %p49, %p50
      %s53 = sadd.s32 %s52, 1
      %p56 = scmp.eq.s32.totalorder %s18, 1
      %p57 = scmp.ne.s32.totalorder %s52, %s54
      %p58 = scmp.eq.s32.totalorder %s18, 0
      %p59 = por %p57, %p58
      %p60 = scmp.ne.s32.totalorder %s52, %s54
      %p61 = scmp.eq.s32.totalorder %s23, 1
      %p62 = por %p60, %p61
      %p63 = scmp.ne.s32.totalorder %s54, %s55
      %p64 = scmp.eq.s32.totalorder %s23, 0
      %p65 = por %p63, %p64
      %p66 = scmp.ne.s32.totalorder %s54, %s55
      %p67 = scmp.eq.s32.totalorder %s24, 1
      %p68 = por %p66, %p67
      %p70 = scmp.ne.s32.totalorder %s55, %s69
      %p71 = scmp.eq.s32.totalorder %s24, 0
      %p72 = por %p70, %p71
      %s74 = sadd.s32 %s73, 1
      %p77 = scmp.eq.s32.totalorder %s18, 1
      %p78 = scmp.ne.s32.totalorder %s73, %s75
      %p79 = scmp.eq.s32.totalorder %s18, 0
      %p80 = por %p78, %p79
      %p81 = scmp.ne.s32.totalorder %s73, %s75
      %p82 = scmp.eq.s32.totalorder %s23, 1
      %p83 = por %p81, %p82
      %p84 = scmp.ne.s32.totalorder %s75, %s76
      %p85 = scmp.eq.s32.totalorder %s23, 0
      %p86 = por %p84, %p85
      %p87 = scmp.ne.s32.totalorder %s75, %s76
      %p88 = scmp.eq.s32.totalorder %s24, 1
      %p89 = por %p87, %p88
      %p91 = scmp.ne.s32.totalorder %s76, %s90
      %p92 = scmp.eq.s32.totalorder %s24, 0
      %p93 = por %p91, %p92
      %s95 = sadd.s32 %s94, 1
      %p98 = scmp.eq.s32.totalorder %s18, 1
      %p99 = scmp.ne.s32.totalorder %s94, %s96
      %p100 = scmp.eq.s32.totalorder %s18, 0
      %p101 = por %p99, %p100
      %p102 = scmp.ne.s32.totalorder %s94, %s96
      %p103 = scmp.eq.s32.totalorder %s23, 1
      %p104 = por %p102, %p103
      %p105 = scmp.ne.s32.totalorder %s96, %s97
      %p106 = scmp.eq.s32.totalorder %s23, 0
      %p107 = por %p105, %p106
      %p108 = scmp.ne.s32.totalorder %s96, %s97
      %p109 = scmp.eq.s32.totalorder %s24, 1
      %p110 = por %p108, %p109
      %p112 = scmp.ne.s32.totalorder %s97, %s111
      %p113 = scmp.eq.s32.totalorder %s24, 0
      %p114 = por %p112, %p113
      %s116 = sadd.s32 %s115, 1
      %p119 = scmp.eq.s32.totalorder %s18, 1
      %p120 = scmp.ne.s32.totalorder %s115, %s117
      %p121 = scmp.eq.s32.totalorder %s18, 0
      %p122 = por %p120, %p121
      %p123 = scmp.ne.s32.totalorder %s115, %s117
      %p124 = scmp.eq.s32.totalorder %s23, 1
      %p125 = por %p123, %p124
      %p126 = scmp.ne.s32.totalorder %s117, %s118
      %p127 = scmp.eq.s32.totalorder %s23, 0
      %p128 = por %p126, %p127
      %p129 = scmp.ne.s32.totalorder %s117, %s118
      %p130 = scmp.eq.s32.totalorder %s24, 1
      %p131 = por %p129, %p130
      %p133 = scmp.ne.s32.totalorder %s118, %s132
      %p134 = scmp.eq.s32.totalorder %s24, 0
      %p135 = por %p133, %p134
      %s136 = ssub.s32 %s18, %s25
      %p137 = scmp.eq.s32.totalorder %s136, 0
      %s139 = sadd.s32 %s138, 1
      %s140 = scalar_select %p137, %s138, %s139
      %p143 = pneg %p137
      %p144 = scmp.eq.s32.totalorder %s18, 1
      %p145 = por %p143, %p144
      %p146 = scmp.ne.s32.totalorder %s138, %s141
      %p147 = scmp.eq.s32.totalorder %s18, 0
      %p148 = por %p146, %p147
      %p149 = scmp.ne.s32.totalorder %s138, %s141
      %p150 = scmp.eq.s32.totalorder %s23, 1
      %p151 = por %p149, %p150
      %p152 = scmp.ne.s32.totalorder %s141, %s142
      %p153 = scmp.eq.s32.totalorder %s23, 0
      %p154 = por %p152, %p153
      %p155 = scmp.ne.s32.totalorder %s141, %s142
      %p156 = scmp.eq.s32.totalorder %s24, 1
      %p157 = por %p155, %p156
      %p159 = scmp.ne.s32.totalorder %s142, %s158
      %p160 = scmp.eq.s32.totalorder %s24, 0
      %p161 = por %p159, %p160
      %p162 = scmp.le.s32.totalorder 1, %s18
      %p163 = scmp.lt.s32.totalorder %s18, 3
      %p164 = pnand %p162, %p163
      %p165 = pneg %p164
      // Predicated region
      $region9: #{tpu_custom_call.1} parent=5 // pred_check
        _
      $region10: #{tpu_custom_call.1} parent=5 // pred_check_branch
        %167 = sbr.rel (%p164) target = $region12
      $region11: #{tpu_custom_call.1} parent=5 // pred_region
        %s168 = ssub.s32 %s18, 1
        // Predicated region
        $region13: #{tpu_custom_call.1} parent=11 // pred_check
          %p169 = pneg %p65
        $region14: #{tpu_custom_call.1} parent=11 // pred_check_branch
          %171 = sbr.rel (%p169) target = $region16
        $region15: #{tpu_custom_call.1} parent=11 // pred_region
          %173 = vsyncadd [#allocation6], 0
          %s174 = sshll.u32 %s1, 4
          %s175 = int_to_ptr.hbm [resolvable:$true] %s174
          %s176 = sshll.u32 [#allocation5], 4
          %s177 = int_to_ptr.vmem [resolvable:$true] %s176
          %182 = dma.hbm_to_vmem [thread:$0]  %s175, 3072, %s177, [#allocation6], 64, 64, 4
        $region16: #{tpu_custom_call.1} parent=11 // pred_fallthru
          _
        // Predicated region
        $region17: #{tpu_custom_call.1} parent=11 // pred_check
          %p183 = pneg %p86
        $region18: #{tpu_custom_call.1} parent=11 // pred_check_branch
          %185 = sbr.rel (%p183) target = $region20
        $region19: #{tpu_custom_call.1} parent=11 // pred_region
          _
        $region20: #{tpu_custom_call.1} parent=11 // pred_fallthru
          _
        // Predicated region
        $region21: #{tpu_custom_call.1} parent=11 // pred_check
          %p186 = pneg %p107
        $region22: #{tpu_custom_call.1} parent=11 // pred_check_branch
          %188 = sbr.rel (%p186) target = $region24
        $region23: #{tpu_custom_call.1} parent=11 // pred_region
          %190 = vsyncadd [#allocation6], 0
          %s191 = sshll.u32 %s3, 4
          %s192 = int_to_ptr.hbm [resolvable:$true] %s191
          %s193 = sshll.u32 [#allocation7], 4
          %s194 = int_to_ptr.vmem [resolvable:$true] %s193
          %199 = dma.hbm_to_vmem [thread:$0]  %s192, 3072, %s194, [#allocation6], 64, 64, 4
        $region24: #{tpu_custom_call.1} parent=11 // pred_fallthru
          _
        // Predicated region
        $region25: #{tpu_custom_call.1} parent=11 // pred_check
          %p200 = pneg %p128
        $region26: #{tpu_custom_call.1} parent=11 // pred_check_branch
          %202 = sbr.rel (%p200) target = $region28
        $region27: #{tpu_custom_call.1} parent=11 // pred_region
          _
        $region28: #{tpu_custom_call.1} parent=11 // pred_fallthru
          _
      $region12: #{tpu_custom_call.1} parent=5 // pred_fallthru
        _
      %p203 = scmp.lt.s32.totalorder %s18, 2
      // Predicated region
      $region29: #{tpu_custom_call.1} parent=5 // pred_check
        %p204 = pneg %p203
      $region30: #{tpu_custom_call.1} parent=5 // pred_check_branch
        %206 = sbr.rel (%p204) target = $region32
      $region31: #{tpu_custom_call.1} parent=5 // pred_region
        // Predicated region
        $region33: #{tpu_custom_call.1} parent=31 // pred_check
          %p207 = pneg %p38
        $region34: #{tpu_custom_call.1} parent=31 // pred_check_branch
          %209 = sbr.rel (%p207) target = $region36
        $region35: #{tpu_custom_call.1} parent=31 // pred_region
          %s210 = sand.u32 %s28, 1
          %s211 = scalar_lea.sflag [#allocation3], %s210
          %s212 = sand.u32 %s28, 1
          %s213 = smul.addr %s212, 16
          %s214 = scalar_lea.vmem [#allocation2], %s213
          %s215 = smul.u32 2, %s18
          %217 = vsyncadd %s211, 0
          %s218 = smul.addr %s215, 8
          %s219 = scalar_lea.hbm %s0, %s218
          %s220 = sshll.u32 %s219, 4
          %s221 = int_to_ptr.hbm [resolvable:$true] %s220
          %s222 = sshll.u32 %s214, 4
          %s223 = int_to_ptr.vmem [resolvable:$true] %s222
          %228 = dma.hbm_to_vmem [thread:$0]  %s221, 256, %s223, %s211, 128, 128, 8
        $region36: #{tpu_custom_call.1} parent=31 // pred_fallthru
          _
      $region32: #{tpu_custom_call.1} parent=5 // pred_fallthru
        _
      %p229 = scmp.le.s32.totalorder 1, %s18
      %p230 = scmp.lt.s32.totalorder %s18, 3
      %p231 = pnand %p229, %p230
      %p232 = pneg %p231
      // Predicated region
      $region37: #{tpu_custom_call.1} parent=5 // pred_check
        _
      $region38: #{tpu_custom_call.1} parent=5 // pred_check_branch
        %234 = sbr.rel (%p231) target = $region40
      $region39: #{tpu_custom_call.1} parent=5 // pred_region
        %s235 = ssub.s32 %s18, 1
        %s236 = sand.u32 %s31, 1
        %s237 = scalar_lea.sflag [#allocation3], %s236
        %s238 = sand.u32 %s31, 1
        %s239 = smul.addr %s238, 16
        %s240 = scalar_lea.vmem [#allocation2], %s239
        // Predicated region
        $region41: #{tpu_custom_call.1} parent=39 // pred_check
          %p241 = pneg %p44
        $region42: #{tpu_custom_call.1} parent=39 // pred_check_branch
          %243 = sbr.rel (%p241) target = $region44
        $region43: #{tpu_custom_call.1} parent=39 // pred_region
          %245 = dma.done %s237, 256
        $region44: #{tpu_custom_call.1} parent=39 // pred_fallthru
          _
        // Predicated region
        $region45: #{tpu_custom_call.1} parent=39 // pred_check
          %p246 = pneg %p65
        $region46: #{tpu_custom_call.1} parent=39 // pred_check_branch
          %248 = sbr.rel (%p246) target = $region48
        $region47: #{tpu_custom_call.1} parent=39 // pred_region
          %250 = dma.done [#allocation6], 3072
        $region48: #{tpu_custom_call.1} parent=39 // pred_fallthru
          _
        // Predicated region
        $region49: #{tpu_custom_call.1} parent=39 // pred_check
          %p251 = pneg %p107
        $region50: #{tpu_custom_call.1} parent=39 // pred_check_branch
          %253 = sbr.rel (%p251) target = $region52
        $region51: #{tpu_custom_call.1} parent=39 // pred_region
          %255 = dma.done [#allocation6], 3072
        $region52: #{tpu_custom_call.1} parent=39 // pred_fallthru
          _
        %s256 = sand.u32 %s31, 1
        %s257 = scalar_lea.sflag [#allocation3], %s256
        %s258 = sand.u32 %s31, 1
        %s259 = smul.addr %s258, 16
        %s260 = scalar_lea.vmem [#allocation2], %s259
        %p261 = pneg %p44
        %p262 = pneg %p41
        %p263 = pneg %p65
        %p264 = pneg %p62
        %p265 = pneg %p86
        %p266 = pneg %p83
        %p267 = pneg %p107
        %p268 = pneg %p104
        %p269 = pneg %p128
        %p270 = pneg %p125
        %p271 = pneg %p154
        %p272 = pneg %p151
        %s273 = sand.u32 %s141, 1
        %s274 = scalar_lea.sflag [#allocation4], %s273
        %s275 = sand.u32 %s141, 1
        %s276 = smul.addr %s275, 16
        %s277 = scalar_lea.vmem [#allocation8], %s276
        %s278 = smul.u32 2, %s23
        %s279 = smul.u32 2, %s23
        %v280 = vld [vmem:[%s240] sm:$0xff]
        %v281 = vld [vmem:[%s240 + $0x8] sm:$0xff]
        %v282 = vlaneseq
        %v283 = vshrl.u32 %v282, 7
        %v284 = vadd.s32 %v283, 8
        %vm285 = vcmp.lt.s32.totalorder %v283, 0
        %v286 = vsub.s32 0, %v283
        %v287 = vsel %vm285, %v286, %v283
        %v288 = vshrl.u32 %v287, 4
        %v289 = vand.u32 %v287, 15
        %v290 = vsub.s32 0, %v289
        %v291 = vsel %vm285, %v290, %v289
        %vm292 = vcmp.lt.s32.totalorder %v284, 0
        %v293 = vsub.s32 0, %v284
        %v294 = vsel %vm292, %v293, %v284
        %v295 = vshrl.u32 %v294, 4
        %v296 = vand.u32 %v294, 15
        %v297 = vsub.s32 0, %v296
        %v298 = vsel %vm292, %v297, %v296
        %vm299 = vcmp.ne.s32.totalorder %v291, 0
        %vm300 = vcmp.ne.s32.totalorder %v298, 0
        %vm301 = vcmp.lt.s32.totalorder %v291, 0
        %vm302 = vcmp.lt.s32.totalorder %v298, 0
        %vm303 = vmand %vm301, %vm299
        %vm304 = vmand %vm302, %vm300
        %v305 = vadd.s32 %v291, 16
        %v306 = vadd.s32 %v298, 16
        %v307 = vsel %vm303, %v305, %v291
        %v308 = vsel %vm304, %v306, %v298
        %vm309 = vcmp.eq.s32.totalorder %v307, 0
        %vm310 = vcmp.eq.s32.totalorder %v308, 0
        %vm311 = vcmp.eq.s32.totalorder %v307, 15
        %vm312 = vcmp.eq.s32.totalorder %v308, 15
        %v313 = vrot.slane %v280, 7
        %v314 = vrot.slane %v281, 7
        %vm315 = vcmp.lt.s32.totalorder %v283, 1
        %v316 = vsel %vm315, %v313, %v314
        %v317 = vsel %vm315, %v314, %v313
        %v318 = vsel %vm309, 0.0, %v317
        %v319 = vsel %vm310, 0.0, %v316
        %v320 = vrot.slane %v280, 1
        %v321 = vrot.slane %v281, 1
        %vm322 = vcmp.lt.s32.totalorder %v283, 7
        %v323 = vsel %vm322, %v320, %v321
        %v324 = vsel %vm322, %v321, %v320
        %v325 = vsel %vm311, 0.0, %v323
        %v326 = vsel %vm312, 0.0, %v324
        %v327 = vpack.c.bf16 %v319, %v318
        %v328 = vpack.c.bf16 %v281, %v280
        %v329 = vpack.c.bf16 %v326, %v325
        %v330 = vld [vmem:[#allocation5] sm:$0xf]
        %v331 = vld [vmem:[#allocation5 + $0x4] sm:$0xf]
        %v332 = vld [vmem:[#allocation5 + $0x8] sm:$0xf]
        %v333 = vld [vmem:[#allocation5 + $0xc] sm:$0xf]
        %v334 = vld [vmem:[#allocation5 + $0x10] sm:$0xf]
        %v335 = vld [vmem:[#allocation5 + $0x14] sm:$0xf]
        %v336 = vld [vmem:[#allocation5 + $0x18] sm:$0xf]
        %v337 = vld [vmem:[#allocation5 + $0x1c] sm:$0xf]
        %v338 = vld [vmem:[#allocation5 + $0x20] sm:$0xf]
        %v339 = vld [vmem:[#allocation5 + $0x24] sm:$0xf]
        %v340 = vld [vmem:[#allocation5 + $0x28] sm:$0xf]
        %v341 = vld [vmem:[#allocation5 + $0x2c] sm:$0xf]
        %v342 = vld [vmem:[#allocation5 + $0x30] sm:$0xf]
        %v343 = vld [vmem:[#allocation5 + $0x34] sm:$0xf]
        %v344 = vld [vmem:[#allocation5 + $0x38] sm:$0xf]
        %v345 = vld [vmem:[#allocation5 + $0x3c] sm:$0xf]
        %v346 = vld [vmem:[#allocation5 + $0x40] sm:$0xf]
        %v347 = vld [vmem:[#allocation5 + $0x44] sm:$0xf]
        %v348 = vld [vmem:[#allocation5 + $0x48] sm:$0xf]
        %v349 = vld [vmem:[#allocation5 + $0x4c] sm:$0xf]
        %v350 = vld [vmem:[#allocation5 + $0x50] sm:$0xf]
        %v351 = vld [vmem:[#allocation5 + $0x54] sm:$0xf]
        %v352 = vld [vmem:[#allocation5 + $0x58] sm:$0xf]
        %v353 = vld [vmem:[#allocation5 + $0x5c] sm:$0xf]
        %v354 = vld [vmem:[#allocation5 + $0x60] sm:$0xf]
        %v355 = vld [vmem:[#allocation5 + $0x64] sm:$0xf]
        %v356 = vld [vmem:[#allocation5 + $0x68] sm:$0xf]
        %v357 = vld [vmem:[#allocation5 + $0x6c] sm:$0xf]
        %v358 = vld [vmem:[#allocation5 + $0x70] sm:$0xf]
        %v359 = vld [vmem:[#allocation5 + $0x74] sm:$0xf]
        %v360 = vld [vmem:[#allocation5 + $0x78] sm:$0xf]
        %v361 = vld [vmem:[#allocation5 + $0x7c] sm:$0xf]
        %v362 = vld [vmem:[#allocation5 + $0x80] sm:$0xf]
        %v363 = vld [vmem:[#allocation5 + $0x84] sm:$0xf]
        %v364 = vld [vmem:[#allocation5 + $0x88] sm:$0xf]
        %v365 = vld [vmem:[#allocation5 + $0x8c] sm:$0xf]
        %v366 = vld [vmem:[#allocation5 + $0x90] sm:$0xf]
        %v367 = vld [vmem:[#allocation5 + $0x94] sm:$0xf]
        %v368 = vld [vmem:[#allocation5 + $0x98] sm:$0xf]
        %v369 = vld [vmem:[#allocation5 + $0x9c] sm:$0xf]
        %v370 = vld [vmem:[#allocation5 + $0xa0] sm:$0xf]
        %v371 = vld [vmem:[#allocation5 + $0xa4] sm:$0xf]
        %v372 = vld [vmem:[#allocation5 + $0xa8] sm:$0xf]
        %v373 = vld [vmem:[#allocation5 + $0xac] sm:$0xf]
        %v374 = vld [vmem:[#allocation5 + $0xb0] sm:$0xf]
        %v375 = vld [vmem:[#allocation5 + $0xb4] sm:$0xf]
        %v376 = vld [vmem:[#allocation5 + $0xb8] sm:$0xf]
        %v377 = vld [vmem:[#allocation5 + $0xbc] sm:$0xf]
        %v378 = vld [vmem:[%s2] sm:$0x1]
        %v380 = vperm.slane %v378, 0
        %v430 = vunpack.c.l.b16 %v330
        %v431 = vunpack.c.l.b16 %v331
        %v432 = vunpack.c.l.b16 %v332
        %v433 = vunpack.c.l.b16 %v333
        %v434 = vunpack.c.l.b16 %v334
        %v435 = vunpack.c.l.b16 %v335
        %v436 = vunpack.c.l.b16 %v336
        %v437 = vunpack.c.l.b16 %v337
        %v438 = vunpack.c.l.b16 %v338
        %v439 = vunpack.c.l.b16 %v339
        %v440 = vunpack.c.l.b16 %v340
        %v441 = vunpack.c.l.b16 %v341
        %v442 = vunpack.c.l.b16 %v342
        %v443 = vunpack.c.l.b16 %v343
        %v444 = vunpack.c.l.b16 %v344
        %v445 = vunpack.c.l.b16 %v345
        %v446 = vunpack.c.l.b16 %v346
        %v447 = vunpack.c.l.b16 %v347
        %v448 = vunpack.c.l.b16 %v348
        %v449 = vunpack.c.l.b16 %v349
        %v450 = vunpack.c.l.b16 %v350
        %v451 = vunpack.c.l.b16 %v351
        %v452 = vunpack.c.l.b16 %v352
        %v453 = vunpack.c.l.b16 %v353
        %v454 = vunpack.c.l.b16 %v354
        %v455 = vunpack.c.l.b16 %v355
        %v456 = vunpack.c.l.b16 %v356
        %v457 = vunpack.c.l.b16 %v357
        %v458 = vunpack.c.l.b16 %v358
        %v459 = vunpack.c.l.b16 %v359
        %v460 = vunpack.c.l.b16 %v360
        %v461 = vunpack.c.l.b16 %v361
        %v462 = vunpack.c.l.b16 %v362
        %v463 = vunpack.c.l.b16 %v363
        %v464 = vunpack.c.l.b16 %v364
        %v465 = vunpack.c.l.b16 %v365
        %v466 = vunpack.c.l.b16 %v366
        %v467 = vunpack.c.l.b16 %v367
        %v468 = vunpack.c.l.b16 %v368
        %v469 = vunpack.c.l.b16 %v369
        %v470 = vunpack.c.l.b16 %v370
        %v471 = vunpack.c.l.b16 %v371
        %v472 = vunpack.c.l.b16 %v372
        %v473 = vunpack.c.l.b16 %v373
        %v474 = vunpack.c.l.b16 %v374
        %v475 = vunpack.c.l.b16 %v375
        %v476 = vunpack.c.l.b16 %v376
        %v477 = vunpack.c.l.b16 %v377
        %v478 = vpack.c.b16 %v431, %v430
        %v479 = vpack.c.b16 %v433, %v432
        %v480 = vpack.c.b16 %v435, %v434
        %v481 = vpack.c.b16 %v437, %v436
        %v482 = vpack.c.b16 %v439, %v438
        %v483 = vpack.c.b16 %v441, %v440
        %v484 = vpack.c.b16 %v443, %v442
        %v485 = vpack.c.b16 %v445, %v444
        %v486 = vpack.c.b16 %v447, %v446
        %v487 = vpack.c.b16 %v449, %v448
        %v488 = vpack.c.b16 %v451, %v450
        %v489 = vpack.c.b16 %v453, %v452
        %v490 = vpack.c.b16 %v455, %v454
        %v491 = vpack.c.b16 %v457, %v456
        %v492 = vpack.c.b16 %v459, %v458
        %v493 = vpack.c.b16 %v461, %v460
        %v494 = vpack.c.b16 %v463, %v462
        %v495 = vpack.c.b16 %v465, %v464
        %v496 = vpack.c.b16 %v467, %v466
        %v497 = vpack.c.b16 %v469, %v468
        %v498 = vpack.c.b16 %v471, %v470
        %v499 = vpack.c.b16 %v473, %v472
        %v500 = vpack.c.b16 %v475, %v474
        %v501 = vpack.c.b16 %v477, %v476
        %526 = vmatpush.bf16.msra.mxu0 %v485
        %527 = vmatpush.bf16.msra.mxu0 %v484
        %528 = vmatpush.bf16.msra.mxu0 %v483
        %529 = vmatpush.bf16.msra.mxu0 %v482
        %530 = vmatpush.bf16.msra.mxu0 %v481
        %531 = vmatpush.bf16.msra.mxu0 %v480
        %532 = vmatpush.bf16.msra.mxu0 %v479
        %533 = vmatpush.bf16.msra.mxu0 %v478
        %534 = vmatmul.bf16.gmra.mxu0 %v327
        %v535 = vpop.f32.mrf.mxu0
        %v536 = vadd.f32 %v380, %v535
        %v537 = vpop.f32.mrf.mxu0
        %v538 = vadd.f32 %v380, %v537
        %539 = vdwg.mxu0
        %540 = vmatpush.bf16.msra.mxu0 %v493
        %541 = vmatpush.bf16.msra.mxu0 %v492
        %542 = vmatpush.bf16.msra.mxu0 %v491
        %543 = vmatpush.bf16.msra.mxu0 %v490
        %544 = vmatpush.bf16.msra.mxu0 %v489
        %545 = vmatpush.bf16.msra.mxu0 %v488
        %546 = vmatpush.bf16.msra.mxu0 %v487
        %547 = vmatpush.bf16.msra.mxu0 %v486
        %548 = vmatmul.bf16.gmra.mxu0 %v328
        %v549 = vpop.f32.mrf.mxu0
        %v550 = vadd.f32 %v536, %v549
        %v551 = vpop.f32.mrf.mxu0
        %v552 = vadd.f32 %v538, %v551
        %553 = vdwg.mxu0
        %554 = vmatpush.bf16.msra.mxu0 %v501
        %555 = vmatpush.bf16.msra.mxu0 %v500
        %556 = vmatpush.bf16.msra.mxu0 %v499
        %557 = vmatpush.bf16.msra.mxu0 %v498
        %558 = vmatpush.bf16.msra.mxu0 %v497
        %559 = vmatpush.bf16.msra.mxu0 %v496
        %560 = vmatpush.bf16.msra.mxu0 %v495
        %561 = vmatpush.bf16.msra.mxu0 %v494
        %562 = vmatmul.bf16.gmra.mxu0 %v329
        %v563 = vpop.f32.mrf.mxu0
        %v564 = vadd.f32 %v550, %v563
        %v565 = vpop.f32.mrf.mxu0
        %v566 = vadd.f32 %v552, %v565
        %567 = vdwg.mxu0
        %v568 = vmax.f32 %v564, 0.0
        %v569 = vmax.f32 %v566, 0.0
        %v570 = vrot.slane %v568, 7
        %v571 = vrot.slane %v569, 7
        %v572 = vsel %vm315, %v570, %v571
        %v573 = vsel %vm315, %v571, %v570
        %v574 = vsel %vm309, 0.0, %v573
        %v575 = vsel %vm310, 0.0, %v572
        %v576 = vrot.slane %v568, 1
        %v577 = vrot.slane %v569, 1
        %v578 = vsel %vm322, %v576, %v577
        %v579 = vsel %vm322, %v577, %v576
        %v580 = vsel %vm311, 0.0, %v578
        %v581 = vsel %vm312, 0.0, %v579
        %v582 = vpack.c.bf16 %v575, %v574
        %v583 = vpack.c.bf16 %v569, %v568
        %v584 = vpack.c.bf16 %v581, %v580
        %v585 = vld [vmem:[#allocation7] sm:$0xf]
        %v586 = vld [vmem:[#allocation7 + $0x4] sm:$0xf]
        %v587 = vld [vmem:[#allocation7 + $0x8] sm:$0xf]
        %v588 = vld [vmem:[#allocation7 + $0xc] sm:$0xf]
        %v589 = vld [vmem:[#allocation7 + $0x10] sm:$0xf]
        %v590 = vld [vmem:[#allocation7 + $0x14] sm:$0xf]
        %v591 = vld [vmem:[#allocation7 + $0x18] sm:$0xf]
        %v592 = vld [vmem:[#allocation7 + $0x1c] sm:$0xf]
        %v593 = vld [vmem:[#allocation7 + $0x20] sm:$0xf]
        %v594 = vld [vmem:[#allocation7 + $0x24] sm:$0xf]
        %v595 = vld [vmem:[#allocation7 + $0x28] sm:$0xf]
        %v596 = vld [vmem:[#allocation7 + $0x2c] sm:$0xf]
        %v597 = vld [vmem:[#allocation7 + $0x30] sm:$0xf]
        %v598 = vld [vmem:[#allocation7 + $0x34] sm:$0xf]
        %v599 = vld [vmem:[#allocation7 + $0x38] sm:$0xf]
        %v600 = vld [vmem:[#allocation7 + $0x3c] sm:$0xf]
        %v601 = vld [vmem:[#allocation7 + $0x40] sm:$0xf]
        %v602 = vld [vmem:[#allocation7 + $0x44] sm:$0xf]
        %v603 = vld [vmem:[#allocation7 + $0x48] sm:$0xf]
        %v604 = vld [vmem:[#allocation7 + $0x4c] sm:$0xf]
        %v605 = vld [vmem:[#allocation7 + $0x50] sm:$0xf]
        %v606 = vld [vmem:[#allocation7 + $0x54] sm:$0xf]
        %v607 = vld [vmem:[#allocation7 + $0x58] sm:$0xf]
        %v608 = vld [vmem:[#allocation7 + $0x5c] sm:$0xf]
        %v609 = vld [vmem:[#allocation7 + $0x60] sm:$0xf]
        %v610 = vld [vmem:[#allocation7 + $0x64] sm:$0xf]
        %v611 = vld [vmem:[#allocation7 + $0x68] sm:$0xf]
        %v612 = vld [vmem:[#allocation7 + $0x6c] sm:$0xf]
        %v613 = vld [vmem:[#allocation7 + $0x70] sm:$0xf]
        %v614 = vld [vmem:[#allocation7 + $0x74] sm:$0xf]
        %v615 = vld [vmem:[#allocation7 + $0x78] sm:$0xf]
        %v616 = vld [vmem:[#allocation7 + $0x7c] sm:$0xf]
        %v617 = vld [vmem:[#allocation7 + $0x80] sm:$0xf]
        %v618 = vld [vmem:[#allocation7 + $0x84] sm:$0xf]
        %v619 = vld [vmem:[#allocation7 + $0x88] sm:$0xf]
        %v620 = vld [vmem:[#allocation7 + $0x8c] sm:$0xf]
        %v621 = vld [vmem:[#allocation7 + $0x90] sm:$0xf]
        %v622 = vld [vmem:[#allocation7 + $0x94] sm:$0xf]
        %v623 = vld [vmem:[#allocation7 + $0x98] sm:$0xf]
        %v624 = vld [vmem:[#allocation7 + $0x9c] sm:$0xf]
        %v625 = vld [vmem:[#allocation7 + $0xa0] sm:$0xf]
        %v626 = vld [vmem:[#allocation7 + $0xa4] sm:$0xf]
        %v627 = vld [vmem:[#allocation7 + $0xa8] sm:$0xf]
        %v628 = vld [vmem:[#allocation7 + $0xac] sm:$0xf]
        %v629 = vld [vmem:[#allocation7 + $0xb0] sm:$0xf]
        %v630 = vld [vmem:[#allocation7 + $0xb4] sm:$0xf]
        %v631 = vld [vmem:[#allocation7 + $0xb8] sm:$0xf]
        %v632 = vld [vmem:[#allocation7 + $0xbc] sm:$0xf]
        %v633 = vld [vmem:[%s4] sm:$0x1]
        %v635 = vperm.slane %v633, 0
        %v685 = vunpack.c.l.b16 %v585
        %v686 = vunpack.c.l.b16 %v586
        %v687 = vunpack.c.l.b16 %v587
        %v688 = vunpack.c.l.b16 %v588
        %v689 = vunpack.c.l.b16 %v589
        %v690 = vunpack.c.l.b16 %v590
        %v691 = vunpack.c.l.b16 %v591
        %v692 = vunpack.c.l.b16 %v592
        %v693 = vunpack.c.l.b16 %v593
        %v694 = vunpack.c.l.b16 %v594
        %v695 = vunpack.c.l.b16 %v595
        %v696 = vunpack.c.l.b16 %v596
        %v697 = vunpack.c.l.b16 %v597
        %v698 = vunpack.c.l.b16 %v598
        %v699 = vunpack.c.l.b16 %v599
        %v700 = vunpack.c.l.b16 %v600
        %v701 = vunpack.c.l.b16 %v601
        %v702 = vunpack.c.l.b16 %v602
        %v703 = vunpack.c.l.b16 %v603
        %v704 = vunpack.c.l.b16 %v604
        %v705 = vunpack.c.l.b16 %v605
        %v706 = vunpack.c.l.b16 %v606
        %v707 = vunpack.c.l.b16 %v607
        %v708 = vunpack.c.l.b16 %v608
        %v709 = vunpack.c.l.b16 %v609
        %v710 = vunpack.c.l.b16 %v610
        %v711 = vunpack.c.l.b16 %v611
        %v712 = vunpack.c.l.b16 %v612
        %v713 = vunpack.c.l.b16 %v613
        %v714 = vunpack.c.l.b16 %v614
        %v715 = vunpack.c.l.b16 %v615
        %v716 = vunpack.c.l.b16 %v616
        %v717 = vunpack.c.l.b16 %v617
        %v718 = vunpack.c.l.b16 %v618
        %v719 = vunpack.c.l.b16 %v619
        %v720 = vunpack.c.l.b16 %v620
        %v721 = vunpack.c.l.b16 %v621
        %v722 = vunpack.c.l.b16 %v622
        %v723 = vunpack.c.l.b16 %v623
        %v724 = vunpack.c.l.b16 %v624
        %v725 = vunpack.c.l.b16 %v625
        %v726 = vunpack.c.l.b16 %v626
        %v727 = vunpack.c.l.b16 %v627
        %v728 = vunpack.c.l.b16 %v628
        %v729 = vunpack.c.l.b16 %v629
        %v730 = vunpack.c.l.b16 %v630
        %v731 = vunpack.c.l.b16 %v631
        %v732 = vunpack.c.l.b16 %v632
        %v733 = vpack.c.b16 %v686, %v685
        %v734 = vpack.c.b16 %v688, %v687
        %v735 = vpack.c.b16 %v690, %v689
        %v736 = vpack.c.b16 %v692, %v691
        %v737 = vpack.c.b16 %v694, %v693
        %v738 = vpack.c.b16 %v696, %v695
        %v739 = vpack.c.b16 %v698, %v697
        %v740 = vpack.c.b16 %v700, %v699
        %v741 = vpack.c.b16 %v702, %v701
        %v742 = vpack.c.b16 %v704, %v703
        %v743 = vpack.c.b16 %v706, %v705
        %v744 = vpack.c.b16 %v708, %v707
        %v745 = vpack.c.b16 %v710, %v709
        %v746 = vpack.c.b16 %v712, %v711
        %v747 = vpack.c.b16 %v714, %v713
        %v748 = vpack.c.b16 %v716, %v715
        %v749 = vpack.c.b16 %v718, %v717
        %v750 = vpack.c.b16 %v720, %v719
        %v751 = vpack.c.b16 %v722, %v721
        %v752 = vpack.c.b16 %v724, %v723
        %v753 = vpack.c.b16 %v726, %v725
        %v754 = vpack.c.b16 %v728, %v727
        %v755 = vpack.c.b16 %v730, %v729
        %v756 = vpack.c.b16 %v732, %v731
        %781 = vmatpush.bf16.msra.mxu0 %v740
        %782 = vmatpush.bf16.msra.mxu0 %v739
        %783 = vmatpush.bf16.msra.mxu0 %v738
        %784 = vmatpush.bf16.msra.mxu0 %v737
        %785 = vmatpush.bf16.msra.mxu0 %v736
        %786 = vmatpush.bf16.msra.mxu0 %v735
        %787 = vmatpush.bf16.msra.mxu0 %v734
        %788 = vmatpush.bf16.msra.mxu0 %v733
        %789 = vmatmul.bf16.gmra.mxu0 %v582
        %v790 = vpop.f32.mrf.mxu0
        %v791 = vadd.f32 %v635, %v790
        %v792 = vpop.f32.mrf.mxu0
        %v793 = vadd.f32 %v635, %v792
        %794 = vdwg.mxu0
        %795 = vmatpush.bf16.msra.mxu0 %v748
        %796 = vmatpush.bf16.msra.mxu0 %v747
        %797 = vmatpush.bf16.msra.mxu0 %v746
        %798 = vmatpush.bf16.msra.mxu0 %v745
        %799 = vmatpush.bf16.msra.mxu0 %v744
        %800 = vmatpush.bf16.msra.mxu0 %v743
        %801 = vmatpush.bf16.msra.mxu0 %v742
        %802 = vmatpush.bf16.msra.mxu0 %v741
        %803 = vmatmul.bf16.gmra.mxu0 %v583
        %v804 = vpop.f32.mrf.mxu0
        %v805 = vadd.f32 %v791, %v804
        %v806 = vpop.f32.mrf.mxu0
        %v807 = vadd.f32 %v793, %v806
        %808 = vdwg.mxu0
        %809 = vmatpush.bf16.msra.mxu0 %v756
        %810 = vmatpush.bf16.msra.mxu0 %v755
        %811 = vmatpush.bf16.msra.mxu0 %v754
        %812 = vmatpush.bf16.msra.mxu0 %v753
        %813 = vmatpush.bf16.msra.mxu0 %v752
        %814 = vmatpush.bf16.msra.mxu0 %v751
        %815 = vmatpush.bf16.msra.mxu0 %v750
        %816 = vmatpush.bf16.msra.mxu0 %v749
        %817 = vmatmul.bf16.gmra.mxu0 %v584
        %v818 = vpop.f32.mrf.mxu0
        %v819 = vadd.f32 %v805, %v818
        %v820 = vpop.f32.mrf.mxu0
        %v821 = vadd.f32 %v807, %v820
        %822 = vdwg.mxu0
        %v823 = vadd.f32 %v819, %v280
        %v824 = vadd.f32 %v821, %v281
        %v825 = vmax.f32 %v823, 0.0
        %v826 = vmax.f32 %v824, 0.0
        %827 = vst [vmem:[%s277] sm:$0xff] %v825
        %828 = vst [vmem:[%s277 + $0x8] sm:$0xff] %v826
        %s829 = sand.u32 %s141, 1
        %s830 = scalar_lea.sflag [#allocation4], %s829
        %s831 = sand.u32 %s141, 1
        %s832 = smul.addr %s831, 16
        %s833 = scalar_lea.vmem [#allocation8], %s832
        // Predicated region
        $region53: #{tpu_custom_call.1} parent=39 // pred_check
          %p834 = pneg %p151
        $region54: #{tpu_custom_call.1} parent=39 // pred_check_branch
          %836 = sbr.rel (%p834) target = $region56
        $region55: #{tpu_custom_call.1} parent=39 // pred_region
          %s837 = smul.u32 2, %s23
          %839 = vsyncadd %s830, 0
          %s840 = smul.addr %s837, 8
          %s841 = scalar_lea.hbm %s5, %s840
          %s842 = sshll.u32 %s833, 4
          %s843 = int_to_ptr.vmem [resolvable:$true] %s842
          %s844 = sshll.u32 %s841, 4
          %s845 = int_to_ptr.hbm [resolvable:$true] %s844
          %850 = dma.vmem_to_hbm [thread:$0]  %s843, 256, %s845, %s830, 128, 128, 8
        $region56: #{tpu_custom_call.1} parent=39 // pred_fallthru
          _
      $region40: #{tpu_custom_call.1} parent=5 // pred_fallthru
        _
      %p851 = scmp.le.s32.totalorder 2, %s18
      // Predicated region
      $region57: #{tpu_custom_call.1} parent=5 // pred_check
        %p852 = pneg %p851
      $region58: #{tpu_custom_call.1} parent=5 // pred_check_branch
        %854 = sbr.rel (%p852) target = $region60
      $region59: #{tpu_custom_call.1} parent=5 // pred_region
        %s855 = ssub.s32 %s18, 2
        // Predicated region
        $region61: #{tpu_custom_call.1} parent=59 // pred_check
          %p856 = pneg %p157
        $region62: #{tpu_custom_call.1} parent=59 // pred_check_branch
          %858 = sbr.rel (%p856) target = $region64
        $region63: #{tpu_custom_call.1} parent=59 // pred_region
          %s859 = sand.u32 %s142, 1
          %s860 = scalar_lea.sflag [#allocation4], %s859
          %s861 = sand.u32 %s142, 1
          %s862 = smul.addr %s861, 16
          %s863 = scalar_lea.vmem [#allocation8], %s862
          %865 = dma.done %s860, 256
        $region64: #{tpu_custom_call.1} parent=59 // pred_fallthru
          _
      $region60: #{tpu_custom_call.1} parent=5 // pred_fallthru
        _
    $region6: #{tpu_custom_call.1} parent=1 // loop_footer
      %s22 = sadd.s32 1, %s18
    $region7: #{tpu_custom_call.1} parent=1 // loop_footer_branch
      %17 = sbr.rel target = $region3
    $region8: #{tpu_custom_call.1} parent=1 // loop_exit
      _
    %866 = vsyncpa [#allocation3], 1
    %s867 = scalar_lea.sflag [#allocation3], 1
    %868 = vsyncpa %s867, 1
    %869 = vsyncpa [#allocation6], 1
    %870 = vsyncpa [#allocation4], 1
    %s871 = scalar_lea.sflag [#allocation4], 1
    %872 = vsyncpa %s871, 1

</llo_original>
